<compile_context>
chip_gen: v7x
topology: tpu7x:2x2x1
jax: 0.10.0
libtpu: 0.0.40
codegen_flags: <defaults>
</compile_context>

<pallas_src>
import functools

import numpy as np
import jax
import jax.numpy as jnp
from jax.experimental import pallas as pl
from jax.experimental.pallas import tpu as pltpu

NORM_EPS = 1e-5


# ----------------------------------------------------------------------------
# Tiny Pallas kernel: per-image SE gate (global squeeze hoisted out of tiles).
# ----------------------------------------------------------------------------
def _se_gate_kernel(xmean_ref, wcat_ref, bcat_ref,
                    wfc1_ref, bfc1_ref, wfc2_ref, bfc2_ref, gate_ref):
    # mean_{HW}(output) == mean_{HW}(x) @ wcat + bcat  (1x1 conv is linear)
    s = jnp.dot(xmean_ref[...], wcat_ref[...],
                preferred_element_type=jnp.float32) + bcat_ref[...]
    z = jnp.maximum(
        jnp.dot(s, wfc1_ref[...], preferred_element_type=jnp.float32)
        + bfc1_ref[...], 0.0)
    gate_ref[...] = jax.nn.sigmoid(
        jnp.dot(z, wfc2_ref[...], preferred_element_type=jnp.float32)
        + bfc2_ref[...])


# ----------------------------------------------------------------------------
# Main Pallas kernel: one (tile_h x W) row-tile of one image per grid step.
# ----------------------------------------------------------------------------
def _mgca_se_kernel(TH, W, use_grouped, groups, flatten_out,
                    x_ref, xt_ref, xb_ref, gate_ref,
                    wcat_ref, bcat_ref, wg_ref, b1_ref,
                    wproj_ref, b2_ref, wscale_ref, bscale_ref,
                    wup_ref, b3_ref, out_ref):
    ti = pl.program_id(1)
    nt = pl.num_programs(1)
    Cin = x_ref.shape[-1]
    C3 = wcat_ref.shape[-1]
    Cnext = wup_ref.shape[-1]

    # --- fused 1x1 convs on the center tile (bf16 x bf16 -> f32)
    x_c = x_ref[0].reshape(TH * W, Cin)
    center_f = (jnp.dot(x_c, wcat_ref[...],
                        preferred_element_type=jnp.float32)
                + bcat_ref[...])                       # (TH*W, C3) f32

    # --- SE gate + conv_scale branch first (shortens f32 `center_f` live span)
    out_se = (center_f * gate_ref[0]).astype(jnp.bfloat16)
    out_temp = jnp.maximum(
        jnp.dot(out_se, wscale_ref[...],
                preferred_element_type=jnp.float32) + bscale_ref[...], 0.0)

    # --- post-1x1-conv halo rows; zero-mask at image borders (conv zero-pad)
    top_mask = (ti > 0).astype(jnp.float32)
    bot_mask = (ti < nt - 1).astype(jnp.float32)
    top_f = (jnp.dot(xt_ref[0, 0], wcat_ref[...],
                     preferred_element_type=jnp.float32)
             + bcat_ref[...]) * top_mask               # (W, C3)
    bot_f = (jnp.dot(xb_ref[0, 0], wcat_ref[...],
                     preferred_element_type=jnp.float32)
             + bcat_ref[...]) * bot_mask               # (W, C3)

    # --- (TH+2, W+2, C3) zero-padded bf16 activation tile for the 3x3 conv
    rows_b = jnp.concatenate(
        [top_f.astype(jnp.bfloat16).reshape(1, W, C3),
         center_f.astype(jnp.bfloat16).reshape(TH, W, C3),
         bot_f.astype(jnp.bfloat16).reshape(1, W, C3)], axis=0)
    zcol = jnp.zeros((TH + 2, 1, C3), jnp.bfloat16)
    padded = jnp.concatenate([zcol, rows_b, zcol], axis=1)   # (TH+2, W+2, C3)

    # --- grouped 3x3 conv (padding=1, bias-free), BN scale folded into weight.
    # 9 accumulating tap matmuls; optional block-diagonal per-group path.
    if use_grouped:
        ic_g = C3 // groups
        oc_g = wg_ref.shape[-1]
        outs = []
        for g in range(groups):
            acc_g = jnp.zeros((TH * W, oc_g), jnp.float32)
            for kh in range(3):
                for kw in range(3):
                    tap = padded[kh:kh + TH, kw:kw + W,
                                 g * ic_g:(g + 1) * ic_g].reshape(TH * W, ic_g)
                    acc_g = acc_g + jnp.dot(
                        tap, wg_ref[g, kh * 3 + kw],
                        preferred_element_type=jnp.float32)
            outs.append(acc_g)
        acc = jnp.concatenate(outs, axis=-1)           # (TH*W, Cout)
    else:
        Cout = wg_ref.shape[-1]
        acc = jnp.zeros((TH * W, Cout), jnp.float32)
        for kh in range(3):
            for kw in range(3):
                tap = padded[kh:kh + TH, kw:kw + W, :].reshape(TH * W, C3)
                acc = acc + jnp.dot(tap, wg_ref[kh * 3 + kw],
                                    preferred_element_type=jnp.float32)

    y = jnp.maximum(acc + b1_ref[...], 0.0)            # BN bias + ReLU

    # --- projection: 1x1 conv (scale2 folded) + bias + ReLU
    out_p = jnp.maximum(
        jnp.dot(y.astype(jnp.bfloat16), wproj_ref[...],
                preferred_element_type=jnp.float32) + b2_ref[...], 0.0)

    # --- elementwise product with the SE/conv_scale branch
    out1 = out_p * out_temp

    # --- conv_upsample: 1x1 conv (scale3 + conv bias folded) + bias + ReLU
    out_fin = jnp.maximum(
        jnp.dot(out1.astype(jnp.bfloat16), wup_ref[...],
                preferred_element_type=jnp.float32) + b3_ref[...], 0.0)

    if flatten_out:
        # lane-dense store: last dim W*Cnext (multiple of 128 for small Cnext)
        out_ref[0] = out_fin.reshape(TH, W * Cnext)
    else:
        out_ref[0] = out_fin.reshape(TH, W, Cnext)


# ----------------------------------------------------------------------------
# Wrapper helpers: VMEM budget, tile sizing, BN folding.
# ----------------------------------------------------------------------------
def _vmem_limit_bytes():
    """Generation-aware VMEM limit: ~75% of physical, conservative fallback."""
    cap = None
    try:
        cap = getattr(pltpu.get_tpu_info(), "vmem_capacity_bytes", None)
    except Exception:
        cap = None
    if not cap:
        return 64 * 1024 * 1024
    return int(min(cap * 3 // 4, 112 * 1024 * 1024))


def _pick_tile_h(H, W, bytes_per_px, vmem_budget):
    """Largest divisor of H that is 8-aligned (or == H) and fits the budget."""
    target_px = max(W, vmem_budget // (3 * max(bytes_per_px, 1)))
    candidates = [t for t in range(1, H + 1)
                  if H % t == 0 and (t % 8 == 0 or t == H)]
    fitting = [t for t in candidates if t * W <= target_px]
    return max(fitting) if fitting else min(candidates)


def prepare_kernel_params(p, use_grouped):
    """Fold BN scales into matmul weights; cast matmul weights to bf16."""
    wg = p["wg"] * p["scale1"]                         # (9, C3, Cout), folded
    if use_grouped:
        groups = int(p["groups"])
        C3, Cout = wg.shape[1], wg.shape[2]
        ic_g, oc_g = C3 // groups, Cout // groups
        blocks = [wg[:, g * ic_g:(g + 1) * ic_g, g * oc_g:(g + 1) * oc_g]
                  for g in range(groups)]
        wg_k = jnp.stack(blocks, axis=0).astype(jnp.bfloat16)  # (g,9,ic_g,oc_g)
    else:
        wg_k = wg.astype(jnp.bfloat16)                 # (9, C3, Cout)
    return dict(
        wcat_b=p["wcat"].astype(jnp.bfloat16),
        bcat=p["bcat"],
        wg_b=wg_k,
        bias1=p["bias1"],
        wproj_b=(p["wproj"] * p["scale2"]).astype(jnp.bfloat16),
        bias2=p["bias2"],
        wscale_b=p["wscale"].astype(jnp.bfloat16),
        bscale=p["bscale"],
        wup_b=(p["wup"] * p["scale3"]).astype(jnp.bfloat16),
        bias3=p["bias3"],
    )


_WEIGHT_ORDER = ("wcat_b", "bcat", "wg_b", "bias1", "wproj_b", "bias2",
                 "wscale_b", "bscale", "wup_b", "bias3")


def mgca_se_forward(x_nchw, params, tile_h=None, grouped_conv=None):
    """x_nchw: (N, Cin, H, W) float32 -> (N, Cnext, H, W) float32."""
    N, Cin, H, W = x_nchw.shape
    C3 = params["wcat"].shape[-1]
    Cout = params["wg"].shape[-1]
    P = params["wproj"].shape[-1]
    Cnext = params["wup"].shape[-1]
    groups = int(params["groups"])

    if grouped_conv is None:
        # Block-diagonal per-group contractions only pay off once each group's
        # output fills the 128-wide lanes; else the dense wide-K path wins.
        grouped_conv = groups > 1 and (Cout // groups) >= 128
    use_grouped = bool(grouped_conv) and groups > 1

    vmem_limit = _vmem_limit_bytes()
    flatten_out = Cnext < 128

    if tile_h is None:
        bytes_per_px = (4 * C3 + 2 * C3 * 3 + 4 * Cout + 8 * P
                        + 8 * Cnext + 4 * Cin)
        tile_h = _pick_tile_h(H, W, bytes_per_px, vmem_limit)
    assert H % tile_h == 0, "tile_h must divide H"
    if flatten_out:
        assert tile_h % 8 == 0 or tile_h == H, (
            "lane-dense output layout needs tile_h % 8 == 0 (or tile_h == H)")
    n_t = H // tile_h

    # --- SE gate pre-pass (tiny, once per image) -----------------------------
    xmean = jnp.mean(x_nchw, axis=(2, 3))              # (N, Cin) f32, no NHWC copy
    gate = pl.pallas_call(
        _se_gate_kernel,
        out_shape=jax.ShapeDtypeStruct((N, C3), jnp.float32),
    )(xmean, params["wcat"], params["bcat"],
      params["wfc1"], params["bfc1"], params["wfc2"], params["bfc2"])
    gate = gate.reshape(N, 1, C3)

    kp = prepare_kernel_params(params, use_grouped)

    # bf16 before the layout transpose: halves transpose bytes.
    x_b = jnp.transpose(x_nchw.astype(jnp.bfloat16), (0, 2, 3, 1))  # (N,H,W,Cin)

    kernel = functools.partial(_mgca_se_kernel, tile_h, W,
                               use_grouped, groups, flatten_out)

    def full_spec(a):
        nd = a.ndim
        return pl.BlockSpec(a.shape, lambda b, i, _nd=nd: (0,) * _nd)

    in_specs = ([
        # center tile
        pl.BlockSpec((1, tile_h, W, Cin), lambda b, i: (b, i, 0, 0)),
        # 1-row halos read directly from x_b with clamped row indices
        # (the out-of-image rows are zero-masked inside the kernel)
        pl.BlockSpec((1, 1, W, Cin),
                     lambda b, i: (b, jnp.maximum(i * tile_h - 1, 0), 0, 0)),
        pl.BlockSpec((1, 1, W, Cin),
                     lambda b, i: (b, jnp.minimum(i * tile_h + tile_h, H - 1),
                                   0, 0)),
        pl.BlockSpec((1, 1, C3), lambda b, i: (b, 0, 0)),
    ] + [full_spec(kp[k]) for k in _WEIGHT_ORDER])

    if flatten_out:
        out_shape = jax.ShapeDtypeStruct((N, H, W * Cnext), jnp.float32)
        out_spec = pl.BlockSpec((1, tile_h, W * Cnext), lambda b, i: (b, i, 0))
    else:
        out_shape = jax.ShapeDtypeStruct((N, H, W, Cnext), jnp.float32)
        out_spec = pl.BlockSpec((1, tile_h, W, Cnext), lambda b, i: (b, i, 0, 0))

    out = pl.pallas_call(
        kernel,
        out_shape=out_shape,
        grid=(N, n_t),
        in_specs=in_specs,
        out_specs=out_spec,
        compiler_params=pltpu.CompilerParams(
            dimension_semantics=("parallel", "parallel"),
            vmem_limit_bytes=vmem_limit),
    )(x_b, x_b, x_b, gate, *[kp[k] for k in _WEIGHT_ORDER])

    out_nhwc = out.reshape(N, H, W, Cnext) if flatten_out else out
    return jnp.transpose(out_nhwc, (0, 3, 1, 2))


# ----------------------------------------------------------------------------
# Deterministic parameter construction (module-style f32 params).
# ----------------------------------------------------------------------------
def _fold_bn(gamma, beta, mean, var, conv_bias=None):
    scale = gamma / jnp.sqrt(var + NORM_EPS)
    bias = beta - mean * scale
    if conv_bias is not None:
        bias = bias + conv_bias * scale
    return scale[None, :], bias[None, :]


def make_params(key, in_channels, out_channels, head_dim,
                projection_out_channels, channels_next_layer,
                se_reduction=4):
    C3 = out_channels * 3
    groups = head_dim
    assert C3 % groups == 0 and out_channels % groups == 0
    Cse = max(C3 // se_reduction, 1)
    ks = list(jax.random.split(key, 20))

    def nrm(k, shape, s=0.1):
        return jax.random.normal(k, shape, jnp.float32) * s

    def bn_params(k, c):
        ka, kb, kc, kd = jax.random.split(k, 4)
        gamma = 1.0 + nrm(ka, (c,))
        beta = nrm(kb, (c,))
        mean = nrm(kc, (c,))
        var = 1.0 + jnp.abs(nrm(kd, (c,)))
        return gamma, beta, mean, var

    # three 1x1 convs (with bias) -> concatenated
    w1 = nrm(ks[0], (in_channels, out_channels))
    w2 = nrm(ks[1], (in_channels, out_channels))
    w3 = nrm(ks[2], (in_channels, out_channels))
    b1 = nrm(ks[3], (out_channels,))
    b2 = nrm(ks[4], (out_channels,))
    b3 = nrm(ks[5], (out_channels,))
    wcat = jnp.concatenate([w1, w2, w3], axis=1)              # (Cin, 3*Cout)
    bcat = jnp.concatenate([b1, b2, b3])[None, :]             # (1, 3*Cout)

    # grouped 3x3 conv weight, densified per tap (zeros off-group).
    ic_g = C3 // groups
    oc_g = out_channels // groups
    w_grp = np.asarray(nrm(ks[6], (out_channels, ic_g, 3, 3)))
    wd = np.zeros((9, C3, out_channels), np.float32)
    for g in range(groups):
        for ol in range(oc_g):
            oc = g * oc_g + ol
            for kh in range(3):
                for kw in range(3):
                    wd[kh * 3 + kw, g * ic_g:(g + 1) * ic_g, oc] = \
                        w_grp[oc, :, kh, kw]
    wg = jnp.asarray(wd)                                      # (9, C3, Cout)

    # self.norm BN (after grouped conv, bias-free)
    scale1, bias1 = _fold_bn(*bn_params(ks[7], out_channels))

    # projection: conv1x1 (no bias) + BN + ReLU
    wproj = nrm(ks[8], (out_channels, projection_out_channels))
    scale2, bias2 = _fold_bn(*bn_params(ks[9], projection_out_channels))

    # SE block
    wfc1 = nrm(ks[10], (C3, Cse))
    bfc1 = nrm(ks[11], (Cse,))[None, :]
    wfc2 = nrm(ks[12], (Cse, C3))
    bfc2 = nrm(ks[13], (C3,))[None, :]

    # conv_scale: 1x1 conv (with bias) + ReLU
    wscale = nrm(ks[14], (C3, projection_out_channels))
    bscale = nrm(ks[15], (projection_out_channels,))[None, :]

    # conv_upsample: 1x1 conv (with bias) + BN + ReLU (bias folded into BN)
    wup = nrm(ks[16], (projection_out_channels, channels_next_layer))
    bup = nrm(ks[17], (channels_next_layer,))
    scale3, bias3 = _fold_bn(*bn_params(ks[18], channels_next_layer),
                             conv_bias=bup)

    return dict(wcat=wcat, bcat=bcat, wg=wg, groups=groups,
                scale1=scale1, bias1=bias1,
                wproj=wproj, scale2=scale2, bias2=bias2,
                wfc1=wfc1, bfc1=bfc1, wfc2=wfc2, bfc2=bfc2,
                wscale=wscale, bscale=bscale,
                wup=wup, scale3=scale3, bias3=bias3)


# ----------------------------------------------------------------------------
# Pure-JAX f32 reference for correctness check.
# ----------------------------------------------------------------------------
def reference(x_nchw, p):
    N, Cin, H, W = x_nchw.shape
    HW = H * W
    xf = jnp.transpose(x_nchw, (0, 2, 3, 1)).reshape(N, HW, Cin)
    output = xf @ p["wcat"] + p["bcat"]
    C3 = output.shape[-1]
    o_hw = output.reshape(N, H, W, C3)
    padded = jnp.pad(o_hw, ((0, 0), (1, 1), (1, 1), (0, 0)))
    acc = 0.0
    for kh in range(3):
        for kw in range(3):
            sl = padded[:, kh:kh + H, kw:kw + W, :].reshape(N, HW, C3)
            acc = acc + sl @ p["wg"][kh * 3 + kw]
    y = jax.nn.relu(acc * p["scale1"] + p["bias1"])
    out_p = jax.nn.relu((y @ p["wproj"]) * p["scale2"] + p["bias2"])
    s = output.mean(axis=1, keepdims=True)
    z = jax.nn.relu(s @ p["wfc1"] + p["bfc1"])
    gate = jax.nn.sigmoid(z @ p["wfc2"] + p["bfc2"])
    out_temp = jax.nn.relu((output * gate) @ p["wscale"] + p["bscale"])
    out1 = out_p * out_temp
    outf = jax.nn.relu((out1 @ p["wup"]) * p["scale3"] + p["bias3"])
    outf = outf.reshape(N, H, W, -1)
    return jnp.transpose(outf, (0, 3, 1, 2))


# ----------------------------------------------------------------------------
if __name__ == "__main__":
    N, Cin, H, W = 2, 4, 16, 16
    out_channels = 8
    head_dim = 4                          # groups for the 3x3 conv
    projection_out_channels = out_channels
    channels_next_layer = 16

    key = jax.random.PRNGKey(0)
    kx, kp = jax.random.split(key)
    x = jax.random.normal(kx, (N, Cin, H, W), jnp.float32)

    params = make_params(kp, Cin, out_channels, head_dim,
                         projection_out_channels, channels_next_layer)

    ref = jax.block_until_ready(reference(x, params))

    # tile_h=8 -> 2 row-tiles per image, exercising the halo path.
    # Default (auto) grouped-conv choice = dense wide-K path at these channels.
    out = jax.block_until_ready(mgca_se_forward(x, params, tile_h=8))
    assert out.shape == (N, channels_next_layer, H, W), out.shape
    # bf16 matmul operands vs f32 reference -> loosened tolerance.
    if not np.allclose(np.asarray(out), np.asarray(ref), rtol=2e-2, atol=2e-2):
        err = float(np.max(np.abs(np.asarray(out) - np.asarray(ref))))
        raise AssertionError(f"Pallas (dense 3x3 path) mismatch, max err {err}")

    # Also validate the block-diagonal per-group 3x3 path (used automatically
    # for large per-group channel counts) by forcing it at the small shapes.
    out_g = jax.block_until_ready(
        mgca_se_forward(x, params, tile_h=8, grouped_conv=True))
    if not np.allclose(np.asarray(out_g), np.asarray(ref), rtol=2e-2, atol=2e-2):
        err = float(np.max(np.abs(np.asarray(out_g) - np.asarray(ref))))
        raise AssertionError(f"Pallas (grouped 3x3 path) mismatch, max err {err}")

    print("KERNEL_OK")
</pallas_src>

<mosaic_0001>
module attributes {stable_mosaic.version = 11 : i64} {
  func.func @_se_gate_kernel(%arg0: memref<2x4xf32, #tpu.memory_space<vmem>>, %arg1: memref<4x24xf32, #tpu.memory_space<vmem>>, %arg2: memref<1x24xf32, #tpu.memory_space<vmem>>, %arg3: memref<24x6xf32, #tpu.memory_space<vmem>>, %arg4: memref<1x6xf32, #tpu.memory_space<vmem>>, %arg5: memref<6x24xf32, #tpu.memory_space<vmem>>, %arg6: memref<1x24xf32, #tpu.memory_space<vmem>>, %arg7: memref<2x24xf32, #tpu.memory_space<vmem>>) attributes {dimension_semantics = [], scalar_prefetch = 0 : i64, scratch_operands = 0 : i64, tpu.core_type = #tpu.core_type<tc>} {
    %c0 = arith.constant 0 : index
    %c0_0 = arith.constant 0 : index
    %0 = vector.load %arg0[%c0, %c0_0] : memref<2x4xf32, #tpu.memory_space<vmem>>, vector<2x4xf32>
    %c0_1 = arith.constant 0 : index
    %c0_2 = arith.constant 0 : index
    %1 = vector.load %arg1[%c0_1, %c0_2] : memref<4x24xf32, #tpu.memory_space<vmem>>, vector<4x24xf32>
    %cst = arith.constant dense<0.000000e+00> : vector<2x24xf32>
    %2 = tpu.matmul %0, %1, %cst {dimension_numbers = #tpu.dot_dimension_numbers<[1], [0], [0], [1], [0, 0, 1, 1], [], []>} : vector<2x4xf32>, vector<4x24xf32>, vector<2x24xf32> -> vector<2x24xf32>
    %c0_3 = arith.constant 0 : index
    %c0_4 = arith.constant 0 : index
    %3 = vector.load %arg2[%c0_3, %c0_4] : memref<1x24xf32, #tpu.memory_space<vmem>>, vector<1x24xf32>
    %4 = vector.broadcast %3 : vector<1x24xf32> to vector<2x24xf32>
    %5 = arith.addf %2, %4 : vector<2x24xf32>
    %c0_5 = arith.constant 0 : index
    %c0_6 = arith.constant 0 : index
    %6 = vector.load %arg3[%c0_5, %c0_6] : memref<24x6xf32, #tpu.memory_space<vmem>>, vector<24x6xf32>
    %cst_7 = arith.constant dense<0.000000e+00> : vector<2x6xf32>
    %7 = tpu.matmul %5, %6, %cst_7 {dimension_numbers = #tpu.dot_dimension_numbers<[1], [0], [0], [1], [0, 0, 1, 1], [], []>} : vector<2x24xf32>, vector<24x6xf32>, vector<2x6xf32> -> vector<2x6xf32>
    %c0_8 = arith.constant 0 : index
    %c0_9 = arith.constant 0 : index
    %8 = vector.load %arg4[%c0_8, %c0_9] : memref<1x6xf32, #tpu.memory_space<vmem>>, vector<1x6xf32>
    %9 = vector.broadcast %8 : vector<1x6xf32> to vector<2x6xf32>
    %10 = arith.addf %7, %9 : vector<2x6xf32>
    %cst_10 = arith.constant 0.000000e+00 : f32
    %11 = vector.broadcast %cst_10 : f32 to vector<2x6xf32>
    %12 = arith.maximumf %10, %11 : vector<2x6xf32>
    %c0_11 = arith.constant 0 : index
    %c0_12 = arith.constant 0 : index
    %13 = vector.load %arg5[%c0_11, %c0_12] : memref<6x24xf32, #tpu.memory_space<vmem>>, vector<6x24xf32>
    %cst_13 = arith.constant dense<0.000000e+00> : vector<2x24xf32>
    %14 = tpu.matmul %12, %13, %cst_13 {dimension_numbers = #tpu.dot_dimension_numbers<[1], [0], [0], [1], [0, 0, 1, 1], [], []>} : vector<2x6xf32>, vector<6x24xf32>, vector<2x24xf32> -> vector<2x24xf32>
    %c0_14 = arith.constant 0 : index
    %c0_15 = arith.constant 0 : index
    %15 = vector.load %arg6[%c0_14, %c0_15] : memref<1x24xf32, #tpu.memory_space<vmem>>, vector<1x24xf32>
    %16 = vector.broadcast %15 : vector<1x24xf32> to vector<2x24xf32>
    %17 = arith.addf %14, %16 : vector<2x24xf32>
    %18 = arith.negf %17 : vector<2x24xf32>
    %19 = math.exp %18 : vector<2x24xf32>
    %cst_16 = arith.constant 1.000000e+00 : f32
    %20 = vector.broadcast %cst_16 : f32 to vector<2x24xf32>
    %21 = arith.addf %20, %19 : vector<2x24xf32>
    %22 = arith.divf %20, %21 : vector<2x24xf32>
    %c0_17 = arith.constant 0 : index
    %c0_18 = arith.constant 0 : index
    %23 = vector.load %arg7[%c0_17, %c0_18] : memref<2x24xf32, #tpu.memory_space<vmem>>, vector<2x24xf32>
    tpu.vector_store %arg7[%c0_17, %c0_18], %22 {strides = array<i32>} : memref<2x24xf32, #tpu.memory_space<vmem>>, vector<2x24xf32>,
    return
  }
}

</mosaic_0001>

<llo_original>
// kernel: tpu_custom_call.1
$region0: #{tpu_custom_call.1}
  #allocation0 [shape = 'u32[]', space=smem, size = 0x4, offset = 0x4, fixed_abs, tag = 'smem constant byte address 0x4 - core index']
  #allocation1 [shape = 'u32[144,128]{1,0:T(1,128)}', space=vmem, size = 0x12000, scoped, tag = 'internal scratch']
  %s0 = inlined_call_operand.vmem [shape: f32[2,4], index: 0, kind: input, shape index: {}]
  %s1 = inlined_call_operand.vmem [shape: f32[4,24], index: 1, kind: input, shape index: {}]
  %s2 = inlined_call_operand.vmem [shape: f32[1,24], index: 2, kind: input, shape index: {}]
  %s3 = inlined_call_operand.vmem [shape: f32[24,6], index: 3, kind: input, shape index: {}]
  %s4 = inlined_call_operand.vmem [shape: f32[1,6], index: 4, kind: input, shape index: {}]
  %s5 = inlined_call_operand.vmem [shape: f32[6,24], index: 5, kind: input, shape index: {}]
  %s6 = inlined_call_operand.vmem [shape: f32[1,24], index: 6, kind: input, shape index: {}]
  %s7 = inlined_call_operand.hbm [shape: f32[2,24], index: 7, kind: output, shape index: {}]
  %s8 = sld [smem:[#allocation0]]
  $region38: #{tpu_custom_call.1} parent=0
    _
  %s10 = ssub.s32 1, %s8
  %s11 = scalar_select 0, %s10, %s8
  $region1: #{tpu_custom_call.1} parent=0
    #allocation2 [shape = 'u8[1024]{0}', space=vmem, size = 0x400, scoped, tag = 'output window, operand 0, single buffered']
    #allocation3 [shape = 's32[1]{0}', space=sflag, size = 0x4, scoped, tag = 'scoped memory for tpu_custom_call.1']
    %12 = vsyncpa [#allocation3], 0
    // Predicated region
    $region2: #{tpu_custom_call.1} parent=1 // pred_check
      _
    $region3: #{tpu_custom_call.1} parent=1 // pred_check_branch
      %14 = sbr.rel (0) target = $region5
    $region4: #{tpu_custom_call.1} parent=1 // pred_region
      _
    $region5: #{tpu_custom_call.1} parent=1 // pred_fallthru
      _
    // Predicated region
    $region6: #{tpu_custom_call.1} parent=1 // pred_check
      _
    $region7: #{tpu_custom_call.1} parent=1 // pred_check_branch
      %16 = sbr.rel (0) target = $region9
    $region8: #{tpu_custom_call.1} parent=1 // pred_region
      _
    $region9: #{tpu_custom_call.1} parent=1 // pred_fallthru
      _
    // Predicated region
    $region10: #{tpu_custom_call.1} parent=1 // pred_check
      _
    $region11: #{tpu_custom_call.1} parent=1 // pred_check_branch
      %18 = sbr.rel (0) target = $region13
    $region12: #{tpu_custom_call.1} parent=1 // pred_region
      _
    $region13: #{tpu_custom_call.1} parent=1 // pred_fallthru
      _
    // Predicated region
    $region14: #{tpu_custom_call.1} parent=1 // pred_check
      _
    $region15: #{tpu_custom_call.1} parent=1 // pred_check_branch
      %20 = sbr.rel (0) target = $region17
    $region16: #{tpu_custom_call.1} parent=1 // pred_region
      _
    $region17: #{tpu_custom_call.1} parent=1 // pred_fallthru
      _
    // Predicated region
    $region18: #{tpu_custom_call.1} parent=1 // pred_check
      _
    $region19: #{tpu_custom_call.1} parent=1 // pred_check_branch
      %22 = sbr.rel (0) target = $region21
    $region20: #{tpu_custom_call.1} parent=1 // pred_region
      _
    $region21: #{tpu_custom_call.1} parent=1 // pred_fallthru
      _
    // Predicated region
    $region22: #{tpu_custom_call.1} parent=1 // pred_check
      _
    $region23: #{tpu_custom_call.1} parent=1 // pred_check_branch
      %24 = sbr.rel (0) target = $region25
    $region24: #{tpu_custom_call.1} parent=1 // pred_region
      _
    $region25: #{tpu_custom_call.1} parent=1 // pred_fallthru
      _
    // Predicated region
    $region26: #{tpu_custom_call.1} parent=1 // pred_check
      _
    $region27: #{tpu_custom_call.1} parent=1 // pred_check_branch
      %26 = sbr.rel (0) target = $region29
    $region28: #{tpu_custom_call.1} parent=1 // pred_region
      _
    $region29: #{tpu_custom_call.1} parent=1 // pred_fallthru
      _
    %v27 = vld [vmem:[%s0] sm:$0x3]
    %v28 = vld [vmem:[%s1] sm:$0xf]
    %v29 = vld [vmem:[%s2] sm:$0x1]
    %v31 = vlaneseq
    %v32 = vshrl.u32 %v31, 7
    %v33 = vsub.s32 0, %v32
    %v34 = vrot.slane %v29, %v33
    %vm36 = vcmask 31744
    %v38 = vsel %vm36, %v27, 0
    %vm40 = vcmask 1043456
    %v42 = vsel %vm40, %v28, 0
    %44 = vmatprep.subr.mxu0 0.0
    %45 = vmatpush1.msra.mxu0 %v42
    %46 = vmatprep.subr.mxu0 0.0
    %47 = vmatpush1.msra.mxu0 0.0
    %48 = vmatprep.subr.mxu0 0.0
    %49 = vmatpush1.msra.mxu0 0.0
    %50 = vmatprep.subr.mxu0 0.0
    %51 = vmatpush1.msra.mxu0 0.0
    %52 = vmatprep.subr.mxu0 0.0
    %53 = vmatpush1.msra.mxu0 0.0
    %54 = vmatprep.subr.mxu0 0.0
    %55 = vmatpush1.msra.mxu0 0.0
    %56 = vmatprep.subr.mxu0 0.0
    %57 = vmatpush1.msra.mxu0 0.0
    %58 = vmatprep.subr.mxu0 0.0
    %59 = vmatpush1.msra.mxu0 0.0
    %60 = vmatprep.subr.mxu0 0.0
    %61 = vmatpush1.msra.mxu0 0.0
    %62 = vmatprep.subr.mxu0 0.0
    %63 = vmatpush1.msra.mxu0 0.0
    %64 = vmatprep.subr.mxu0 0.0
    %65 = vmatpush1.msra.mxu0 0.0
    %66 = vmatprep.subr.mxu0 0.0
    %67 = vmatpush1.msra.mxu0 0.0
    %68 = vmatprep.subr.mxu0 0.0
    %69 = vmatpush1.msra.mxu0 0.0
    %70 = vmatprep.subr.mxu0 0.0
    %71 = vmatpush1.msra.mxu0 0.0
    %72 = vmatprep.subr.mxu0 0.0
    %73 = vmatpush1.msra.mxu0 0.0
    %74 = vmatprep.subr.mxu0 0.0
    %75 = vmatpush1.msra.mxu0 0.0
    %76 = vmatprep.subr.mxu0 0.0
    %77 = vmatpush1.msra.mxu0 0.0
    %78 = vmatprep.subr.mxu0 0.0
    %79 = vmatpush1.msra.mxu0 0.0
    %80 = vmatprep.subr.mxu0 0.0
    %81 = vmatpush1.msra.mxu0 0.0
    %82 = vmatprep.subr.mxu0 0.0
    %83 = vmatpush1.msra.mxu0 0.0
    %84 = vmatprep.subr.mxu0 0.0
    %85 = vmatpush1.msra.mxu0 0.0
    %86 = vmatprep.subr.mxu0 0.0
    %87 = vmatpush1.msra.mxu0 0.0
    %88 = vmatprep.subr.mxu0 0.0
    %89 = vmatpush1.msra.mxu0 0.0
    %90 = vmatprep.subr.mxu0 0.0
    %91 = vmatpush1.msra.mxu0 0.0
    %92 = vmatprep.subr.mxu0 0.0
    %93 = vmatpush1.msra.mxu0 0.0
    %94 = vmatprep.subr.mxu0 0.0
    %95 = vmatpush1.msra.mxu0 0.0
    %96 = vmatprep.subr.mxu0 0.0
    %97 = vmatpush1.msra.mxu0 0.0
    %98 = vmatprep.subr.mxu0 0.0
    %99 = vmatpush1.msra.mxu0 0.0
    %100 = vmatprep.subr.mxu0 0.0
    %101 = vmatpush1.msra.mxu0 0.0
    %102 = vmatprep.subr.mxu0 0.0
    %103 = vmatpush1.msra.mxu0 0.0
    %104 = vmatprep.subr.mxu0 0.0
    %105 = vmatpush1.msra.mxu0 0.0
    %106 = vmatprep.subr.mxu0 0.0
    %107 = vmatpush1.msra.mxu0 0.0
    %108 = vmatprep.mubr.f32.mxu0 0.0
    %109 = vmatmul.mubr.f32.gmra.mrb[0].mxu0 %v38
    %v110 = vpop.f32.mrb[0].mxu0
    %v111 = vadd.f32 %v34, %v110
    %v112 = vpop.f32.mrb[0].mxu0
    %113 = vdwg.mxu0
    %v114 = vld [vmem:[%s3] sm:$0xff]
    %v115 = vld [vmem:[%s3 + $0x8] sm:$0xff]
    %v116 = vld [vmem:[%s3 + $0x10] sm:$0xff]
    %v117 = vld [vmem:[%s4] sm:$0x1]
    %v119 = vlaneseq
    %v120 = vshrl.u32 %v119, 7
    %v121 = vsub.s32 0, %v120
    %v122 = vrot.slane %v117, %v121
    %vm124 = vcmask 195584
    %v126 = vsel %vm124, %v111, 0
    %128 = vmatprep.subr.mxu0 0.0
    %129 = vmatpush1.msra.mxu0 %v114
    %130 = vmatprep.subr.mxu0 0.0
    %131 = vmatpush1.msra.mxu0 %v115
    %132 = vmatprep.subr.mxu0 0.0
    %133 = vmatpush1.msra.mxu0 %v116
    %134 = vmatprep.subr.mxu0 0.0
    %135 = vmatpush1.msra.mxu0 0.0
    %136 = vmatprep.subr.mxu0 0.0
    %137 = vmatpush1.msra.mxu0 0.0
    %138 = vmatprep.subr.mxu0 0.0
    %139 = vmatpush1.msra.mxu0 0.0
    %140 = vmatprep.subr.mxu0 0.0
    %141 = vmatpush1.msra.mxu0 0.0
    %142 = vmatprep.subr.mxu0 0.0
    %143 = vmatpush1.msra.mxu0 0.0
    %144 = vmatprep.subr.mxu0 0.0
    %145 = vmatpush1.msra.mxu0 0.0
    %146 = vmatprep.subr.mxu0 0.0
    %147 = vmatpush1.msra.mxu0 0.0
    %148 = vmatprep.subr.mxu0 0.0
    %149 = vmatpush1.msra.mxu0 0.0
    %150 = vmatprep.subr.mxu0 0.0
    %151 = vmatpush1.msra.mxu0 0.0
    %152 = vmatprep.subr.mxu0 0.0
    %153 = vmatpush1.msra.mxu0 0.0
    %154 = vmatprep.subr.mxu0 0.0
    %155 = vmatpush1.msra.mxu0 0.0
    %156 = vmatprep.subr.mxu0 0.0
    %157 = vmatpush1.msra.mxu0 0.0
    %158 = vmatprep.subr.mxu0 0.0
    %159 = vmatpush1.msra.mxu0 0.0
    %160 = vmatprep.subr.mxu0 0.0
    %161 = vmatpush1.msra.mxu0 0.0
    %162 = vmatprep.subr.mxu0 0.0
    %163 = vmatpush1.msra.mxu0 0.0
    %164 = vmatprep.subr.mxu0 0.0
    %165 = vmatpush1.msra.mxu0 0.0
    %166 = vmatprep.subr.mxu0 0.0
    %167 = vmatpush1.msra.mxu0 0.0
    %168 = vmatprep.subr.mxu0 0.0
    %169 = vmatpush1.msra.mxu0 0.0
    %170 = vmatprep.subr.mxu0 0.0
    %171 = vmatpush1.msra.mxu0 0.0
    %172 = vmatprep.subr.mxu0 0.0
    %173 = vmatpush1.msra.mxu0 0.0
    %174 = vmatprep.subr.mxu0 0.0
    %175 = vmatpush1.msra.mxu0 0.0
    %176 = vmatprep.subr.mxu0 0.0
    %177 = vmatpush1.msra.mxu0 0.0
    %178 = vmatprep.subr.mxu0 0.0
    %179 = vmatpush1.msra.mxu0 0.0
    %180 = vmatprep.subr.mxu0 0.0
    %181 = vmatpush1.msra.mxu0 0.0
    %182 = vmatprep.subr.mxu0 0.0
    %183 = vmatpush1.msra.mxu0 0.0
    %184 = vmatprep.subr.mxu0 0.0
    %185 = vmatpush1.msra.mxu0 0.0
    %186 = vmatprep.subr.mxu0 0.0
    %187 = vmatpush1.msra.mxu0 0.0
    %188 = vmatprep.subr.mxu0 0.0
    %189 = vmatpush1.msra.mxu0 0.0
    %190 = vmatprep.subr.mxu0 0.0
    %191 = vmatpush1.msra.mxu0 0.0
    %192 = vmatprep.mubr.f32.mxu0 0.0
    %193 = vmatmul.mubr.f32.gmra.mrb[0].mxu0 %v126
    %v194 = vpop.f32.mrb[0].mxu0
    %v195 = vadd.f32 %v122, %v194
    %v196 = vpop.f32.mrb[0].mxu0
    %197 = vdwg.mxu0
    %v198 = vmax.f32 %v195, 0.0
    %v199 = vld [vmem:[%s5] sm:$0x3f]
    %v200 = vld [vmem:[%s6] sm:$0x1]
    %v202 = vlaneseq
    %v203 = vshrl.u32 %v202, 7
    %v204 = vsub.s32 0, %v203
    %v205 = vrot.slane %v200, %v204
    %vm207 = vcmask 48128
    %v209 = vsel %vm207, %v198, 0
    %vm211 = vcmask 1045504
    %v213 = vsel %vm211, %v199, 0
    %215 = vmatprep.subr.mxu0 0.0
    %216 = vmatpush1.msra.mxu0 %v213
    %217 = vmatprep.subr.mxu0 0.0
    %218 = vmatpush1.msra.mxu0 0.0
    %219 = vmatprep.subr.mxu0 0.0
    %220 = vmatpush1.msra.mxu0 0.0
    %221 = vmatprep.subr.mxu0 0.0
    %222 = vmatpush1.msra.mxu0 0.0
    %223 = vmatprep.subr.mxu0 0.0
    %224 = vmatpush1.msra.mxu0 0.0
    %225 = vmatprep.subr.mxu0 0.0
    %226 = vmatpush1.msra.mxu0 0.0
    %227 = vmatprep.subr.mxu0 0.0
    %228 = vmatpush1.msra.mxu0 0.0
    %229 = vmatprep.subr.mxu0 0.0
    %230 = vmatpush1.msra.mxu0 0.0
    %231 = vmatprep.subr.mxu0 0.0
    %232 = vmatpush1.msra.mxu0 0.0
    %233 = vmatprep.subr.mxu0 0.0
    %234 = vmatpush1.msra.mxu0 0.0
    %235 = vmatprep.subr.mxu0 0.0
    %236 = vmatpush1.msra.mxu0 0.0
    %237 = vmatprep.subr.mxu0 0.0
    %238 = vmatpush1.msra.mxu0 0.0
    %239 = vmatprep.subr.mxu0 0.0
    %240 = vmatpush1.msra.mxu0 0.0
    %241 = vmatprep.subr.mxu0 0.0
    %242 = vmatpush1.msra.mxu0 0.0
    %243 = vmatprep.subr.mxu0 0.0
    %244 = vmatpush1.msra.mxu0 0.0
    %245 = vmatprep.subr.mxu0 0.0
    %246 = vmatpush1.msra.mxu0 0.0
    %247 = vmatprep.subr.mxu0 0.0
    %248 = vmatpush1.msra.mxu0 0.0
    %249 = vmatprep.subr.mxu0 0.0
    %250 = vmatpush1.msra.mxu0 0.0
    %251 = vmatprep.subr.mxu0 0.0
    %252 = vmatpush1.msra.mxu0 0.0
    %253 = vmatprep.subr.mxu0 0.0
    %254 = vmatpush1.msra.mxu0 0.0
    %255 = vmatprep.subr.mxu0 0.0
    %256 = vmatpush1.msra.mxu0 0.0
    %257 = vmatprep.subr.mxu0 0.0
    %258 = vmatpush1.msra.mxu0 0.0
    %259 = vmatprep.subr.mxu0 0.0
    %260 = vmatpush1.msra.mxu0 0.0
    %261 = vmatprep.subr.mxu0 0.0
    %262 = vmatpush1.msra.mxu0 0.0
    %263 = vmatprep.subr.mxu0 0.0
    %264 = vmatpush1.msra.mxu0 0.0
    %265 = vmatprep.subr.mxu0 0.0
    %266 = vmatpush1.msra.mxu0 0.0
    %267 = vmatprep.subr.mxu0 0.0
    %268 = vmatpush1.msra.mxu0 0.0
    %269 = vmatprep.subr.mxu0 0.0
    %270 = vmatpush1.msra.mxu0 0.0
    %271 = vmatprep.subr.mxu0 0.0
    %272 = vmatpush1.msra.mxu0 0.0
    %273 = vmatprep.subr.mxu0 0.0
    %274 = vmatpush1.msra.mxu0 0.0
    %275 = vmatprep.subr.mxu0 0.0
    %276 = vmatpush1.msra.mxu0 0.0
    %277 = vmatprep.subr.mxu0 0.0
    %278 = vmatpush1.msra.mxu0 0.0
    %279 = vmatprep.mubr.f32.mxu0 0.0
    %280 = vmatmul.mubr.f32.gmra.mrb[0].mxu0 %v209
    %v281 = vpop.f32.mrb[0].mxu0
    %v282 = vadd.f32 %v205, %v281
    %v283 = vpop.f32.mrb[0].mxu0
    %284 = vdwg.mxu0
    %v285 = vxor.u32 %v282, 2147483648
    %v286 = vmul.f32 %v285, 1.442695
    %v287 = vpow.pop %v286
    %v288 = vadd.f32 %v287, 1.0
    %v289 = vrcp.pop %v288
    %v290 = vmul.f32 1.0, %v289
    %vm291 = vcmask 189440
    %292 = vst.msk [vmem:[#allocation2] sm:$0x3] %vm291, %v290
    // Predicated region
    $region30: #{tpu_custom_call.1} parent=1 // pred_check
      _
    $region31: #{tpu_custom_call.1} parent=1 // pred_check_branch
      %294 = sbr.rel (0) target = $region33
    $region32: #{tpu_custom_call.1} parent=1 // pred_region
      %s296 = ssub.s32 32, 32
      %297 = vsyncadd [#allocation3], %s296
      %s299 = sshll.u32 [#allocation2], 4
      %s300 = int_to_ptr.vmem [resolvable:$true] %s299
      %302 = dma.vmem_to_hbm [thread:$0]  %s300, 32, %s7, [#allocation3]
    $region33: #{tpu_custom_call.1} parent=1 // pred_fallthru
      _
    // Predicated region
    $region34: #{tpu_custom_call.1} parent=1 // pred_check
      _
    $region35: #{tpu_custom_call.1} parent=1 // pred_check_branch
      %304 = sbr.rel (0) target = $region37
    $region36: #{tpu_custom_call.1} parent=1 // pred_region
      %305 = dma.done [#allocation3], 32
    $region37: #{tpu_custom_call.1} parent=1 // pred_fallthru
      _
    %306 = vsyncpa [#allocation3], 1

</llo_original>
